<compile_context>
chip_gen: v7x
topology: tpu7x:2x2x1
jax: 0.10.0
libtpu: 0.0.40
codegen_flags: <defaults>
</compile_context>

<pallas_src>
import jax
import jax.numpy as jnp
from jax.experimental import pallas as pl
from jax.experimental.pallas import tpu as pltpu


# ---------------- Pallas kernel 1: Sample-layer attention scores ----------------
def _sample_score_kernel(s_ref, p_ref, o_ref, wk_ref, bk_ref, wq_ref, bq_ref, dots_ref):
    # s_ref/o_ref: (emb, TM) bf16; p_ref: (h, TM) f32; wk_ref/wq_ref: (h, emb) bf16; b*: (h, 1) f32
    # tokeys(semb) computed transposed: Wk @ semb^T  (weights pre-transposed in wrapper, no .T here)
    k = jnp.dot(wk_ref[...], s_ref[...], preferred_element_type=jnp.float32) + bk_ref[...]
    q = jnp.dot(wq_ref[...], o_ref[...], preferred_element_type=jnp.float32) + bq_ref[...]
    # elementwise product kept in f32 (v5e VPU has no bf16); sublane reduce -> lane-dense (1, TM) row
    dots_ref[...] = jnp.sum(k * p_ref[...] * q, axis=0, keepdims=True)


def sample_scores(semb, pemb, oemb, wk, bk, wq, bq, *, tile_m=512):
    """semb, oemb: (BM, emb) f32; pemb: (BM, h) f32. Returns dots: (BM,) f32."""
    BM, emb = semb.shape
    h = pemb.shape[1]

    # pad the edge axis to a multiple of 128 so the output row is fully lane-dense and tiles evenly
    BMp = ((BM + 127) // 128) * 128
    pad = BMp - BM
    if pad:
        semb = jnp.pad(semb, ((0, pad), (0, 0)))
        pemb = jnp.pad(pemb, ((0, pad), (0, 0)))
        oemb = jnp.pad(oemb, ((0, pad), (0, 0)))

    # wrapper-side transposes / casts (done once in XLA, not per kernel step)
    s_t = semb.T.astype(jnp.bfloat16)            # (emb, BMp)  MXU operand
    o_t = oemb.T.astype(jnp.bfloat16)            # (emb, BMp)
    p_t = pemb.T.astype(jnp.float32)             # (h, BMp)    stays f32 for VPU math
    wk_t = wk.T.astype(jnp.bfloat16)             # (h, emb)
    wq_t = wq.T.astype(jnp.bfloat16)
    bk_c = bk.reshape(h, 1).astype(jnp.float32)
    bq_c = bq.reshape(h, 1).astype(jnp.float32)

    tm = BMp if BMp <= tile_m else tile_m        # tile_m is a multiple of 128
    grid = (BMp // tm,)

    out = pl.pallas_call(
        _sample_score_kernel,
        out_shape=jax.ShapeDtypeStruct((1, BMp), jnp.float32),
        grid=grid,
        in_specs=[
            pl.BlockSpec((emb, tm), lambda i: (0, i)),
            pl.BlockSpec((h, tm), lambda i: (0, i)),
            pl.BlockSpec((emb, tm), lambda i: (0, i)),
            pl.BlockSpec((h, emb), lambda i: (0, 0)),   # grid-invariant weights / biases
            pl.BlockSpec((h, 1), lambda i: (0, 0)),
            pl.BlockSpec((h, emb), lambda i: (0, 0)),
            pl.BlockSpec((h, 1), lambda i: (0, 0)),
        ],
        out_specs=pl.BlockSpec((1, tm), lambda i: (0, i)),
        compiler_params=pltpu.CompilerParams(dimension_semantics=("parallel",)),
    )(s_t, p_t, o_t, wk_t, bk_c, wq_t, bq_c)
    return out[0, :BM]


# ---------------- Pallas kernel 2: SimpleRGCN combine (single fused matmul + relu) ----------------
def _rgcn_kernel(msg_ref, w_ref, out_ref):
    # msg_ref: (TN, R*d_in) bf16; w_ref: (R*d_in, d_out_pad) bf16 (pre-transposed/flattened in wrapper)
    acc = jnp.dot(msg_ref[...], w_ref[...], preferred_element_type=jnp.float32)
    out_ref[...] = jnp.maximum(acc, 0.0)


def rgcn_layer(msg, weights, *, tile_n=512):
    """msg: (R, N, d_in) f32; weights: (R, d_out, d_in) f32.
    Returns relu(sum_r msg[r] @ W[r].T): (N, d_out) f32 — the relation axis is folded into K."""
    R, N, d_in = msg.shape
    d_out = weights.shape[1]
    K = R * d_in

    # fold relation axis into the contraction: out[n,i] = sum_{r,j} msg[r,n,j] * W[r,i,j]
    msg_flat = jnp.transpose(msg, (1, 0, 2)).reshape(N, K)             # (N, R*d_in)
    w_flat = jnp.transpose(weights, (0, 2, 1)).reshape(K, d_out)       # (R*d_in, d_out), no .T in kernel

    # pad output lanes to 128 so stores are unmasked full vst's
    d_pad = ((d_out + 127) // 128) * 128
    if d_pad != d_out:
        w_flat = jnp.pad(w_flat, ((0, 0), (0, d_pad - d_out)))

    # row tiling (parallel axis; splits across TCs on v7x); toy N=64 uses a single full block
    TN = N if N <= tile_n else tile_n                                  # tile_n multiple of 8 and 128
    Np = ((N + TN - 1) // TN) * TN
    if Np != N:
        msg_flat = jnp.pad(msg_flat, ((0, Np - N), (0, 0)))

    out = pl.pallas_call(
        _rgcn_kernel,
        out_shape=jax.ShapeDtypeStruct((Np, d_pad), jnp.float32),
        grid=(Np // TN,),
        in_specs=[
            pl.BlockSpec((TN, K), lambda i: (i, 0)),
            pl.BlockSpec((K, d_pad), lambda i: (0, 0)),                # grid-invariant weights
        ],
        out_specs=pl.BlockSpec((TN, d_pad), lambda i: (i, 0)),
        compiler_params=pltpu.CompilerParams(dimension_semantics=("parallel",)),
    )(msg_flat.astype(jnp.bfloat16), w_flat.astype(jnp.bfloat16))
    return out[:N, :d_out]


# ---------------- glue: sparse per-relation message aggregation (the util.spmm) ----------------
def aggregate_messages(node_feats, edges, valid, num_rel):
    """edges: (E, 3) int32 rows (s, p, o); valid: (E,) bool mask (padded edges contribute nothing).
    msg[r, o] = mean over valid edges (s, r, o) of node_feats[s]."""
    s, p, o = edges[:, 0], edges[:, 1], edges[:, 2]
    N, D = node_feats.shape
    w = valid.astype(node_feats.dtype)[:, None]
    flat_idx = p * N + o
    msg = jnp.zeros((num_rel * N, D), node_feats.dtype).at[flat_idx].add(node_feats[s] * w)
    cnt = jnp.zeros((num_rel * N, 1), node_feats.dtype).at[flat_idx].add(w)
    # TODO(synk): exact spmm `values` / normalisation are supplied externally in the reference; mean-normalised here.
    return (msg / jnp.maximum(cnt, 1.0)).reshape(num_rel, N, D)


if __name__ == "__main__":
    # small shapes consistent with the module
    N, R, EMB, H, NUM_CLS = 64, 4, 32, 16, 8
    B, M, KSAMPLE, E = 2, 32, 8, 256

    key = jax.random.PRNGKey(0)
    keys = jax.random.split(key, 10)

    # deterministic synthetic graph: E random triples (s, p, o)
    src = jax.random.randint(keys[0], (E,), 0, N, dtype=jnp.int32)
    rel = jax.random.randint(keys[1], (E,), 0, R, dtype=jnp.int32)
    dst = jax.random.randint(keys[2], (E,), 0, N, dtype=jnp.int32)

    # deterministic synthetic parameters (shapes per __init__)
    # TODO(synk): module declares embeddings as (n, h) but RGCN-1 consumes emb-dim node features; use (n, emb).
    embeddings = jax.random.normal(keys[3], (N, EMB), jnp.float32)
    relations = jax.random.normal(keys[4], (R, H), jnp.float32) / jnp.sqrt(H)
    wk = jax.random.normal(keys[5], (EMB, H), jnp.float32) / jnp.sqrt(EMB)   # tokeys  (emb -> h)
    bk = jnp.zeros((H,), jnp.float32)
    wq = jax.random.normal(keys[6], (EMB, H), jnp.float32) / jnp.sqrt(EMB)   # toqueries (emb -> h)
    bq = jnp.zeros((H,), jnp.float32)
    w1 = jax.random.normal(keys[7], (R, H, EMB), jnp.float32) / jnp.sqrt(EMB)      # RGCN-1: emb -> h
    w2 = jax.random.normal(keys[8], (R, NUM_CLS, H), jnp.float32) / jnp.sqrt(H)    # RGCN-2: h  -> num_cls

    # ---- Sample layer: gather candidate incident edges per batch instance (host-side glue) ----
    batch_nodes = [3, 7]  # seed nodes, one per batch instance
    src_h, rel_h, dst_h = jax.device_get(src), jax.device_get(rel), jax.device_get(dst)
    cand, nreal = [], []
    for bn in batch_nodes:
        inc = [(int(src_h[e]), int(rel_h[e]), int(dst_h[e]))
               for e in range(E) if int(src_h[e]) == bn or int(dst_h[e]) == bn]
        inc = inc[:M]
        nreal.append(len(inc))
        inc = inc + [(0, 0, 0)] * (M - len(inc))
        cand.append(inc)
    cand = jnp.asarray(cand, dtype=jnp.int32)                                  # (B, M, 3)
    valid_cand = jnp.arange(M)[None, :] < jnp.asarray(nreal, jnp.int32)[:, None]  # (B, M) padded-edge mask

    flat = cand.reshape(B * M, 3)
    semb = embeddings[flat[:, 0]]
    pemb = relations[flat[:, 1]]
    oemb = embeddings[flat[:, 2]]
    dots = sample_scores(semb, pemb, oemb, wk, bk, wq, bq).reshape(B, M)

    # TODO(synk): original uses weighted reservoir sampling (u.log()/dots); deterministic top-k by score here.
    dots = jnp.where(valid_cand, dots, -jnp.inf)                   # padded candidates can never win top-k
    order = jnp.argsort(-dots, axis=1)[:, :KSAMPLE]                # (B, K)
    sampled = jnp.take_along_axis(cand, order[:, :, None], axis=1)       # (B, K, 3)
    sampled_valid = jnp.take_along_axis(valid_cand, order, axis=1)       # (B, K)
    # TODO(synk): second Sample layer needs host-side data-dependent graph expansion; one sampling round shown.
    batch_edges = sampled.reshape(B * KSAMPLE, 3)
    batch_valid = sampled_valid.reshape(B * KSAMPLE)

    # ---- RGCN layer 1 (emb -> h) ----
    msg1 = aggregate_messages(embeddings, batch_edges, batch_valid, R)   # (R, N, EMB)
    h1 = rgcn_layer(msg1, w1)                                            # (N, H)

    # ---- RGCN layer 2 (h -> num_cls) ----
    msg2 = aggregate_messages(h1, batch_edges, batch_valid, R)           # (R, N, H)
    logits = rgcn_layer(msg2, w2)                                        # (N, NUM_CLS)

    # pooled class scores at the seed nodes
    # TODO(synk): reference calls undefined self.cls; the last RGCN already maps h -> num_cls.
    pooled = logits[jnp.asarray(batch_nodes, dtype=jnp.int32)]           # (B, NUM_CLS)

    jax.block_until_ready(pooled)
    print("KERNEL_OK")
</pallas_src>

<mosaic_0001>
module attributes {stable_mosaic.version = 11 : i64} {
  func.func @_sample_score_kernel(%arg0: i32, %arg1: memref<32x128xbf16, #tpu.memory_space<vmem>>, %arg2: memref<16x128xf32, #tpu.memory_space<vmem>>, %arg3: memref<32x128xbf16, #tpu.memory_space<vmem>>, %arg4: memref<16x32xbf16, #tpu.memory_space<vmem>>, %arg5: memref<16x1xf32, #tpu.memory_space<vmem>>, %arg6: memref<16x32xbf16, #tpu.memory_space<vmem>>, %arg7: memref<16x1xf32, #tpu.memory_space<vmem>>, %arg8: memref<1x128xf32, #tpu.memory_space<vmem>>) attributes {dimension_semantics = [#tpu.dimension_semantics<parallel>], iteration_bounds = array<i64: 1>, scalar_prefetch = 0 : i64, scratch_operands = 0 : i64, tpu.core_type = #tpu.core_type<tc>, window_params = [{transform_indices = @transform_0, window_bounds = array<i64: 32, 128>}, {transform_indices = @transform_1, window_bounds = array<i64: 16, 128>}, {transform_indices = @transform_2, window_bounds = array<i64: 32, 128>}, {pipeline_mode = #tpu.pipeline_mode<synchronous>, transform_indices = @transform_3, window_bounds = array<i64: 16, 32>}, {pipeline_mode = #tpu.pipeline_mode<synchronous>, transform_indices = @transform_4, window_bounds = array<i64: 16, 1>}, {pipeline_mode = #tpu.pipeline_mode<synchronous>, transform_indices = @transform_5, window_bounds = array<i64: 16, 32>}, {pipeline_mode = #tpu.pipeline_mode<synchronous>, transform_indices = @transform_6, window_bounds = array<i64: 16, 1>}, {transform_indices = @transform_7, window_bounds = array<i64: 1, 128>}]} {
    %c0 = arith.constant 0 : index
    %c0_0 = arith.constant 0 : index
    %0 = vector.load %arg4[%c0, %c0_0] : memref<16x32xbf16, #tpu.memory_space<vmem>>, vector<16x32xbf16>
    %c0_1 = arith.constant 0 : index
    %c0_2 = arith.constant 0 : index
    %1 = vector.load %arg1[%c0_1, %c0_2] : memref<32x128xbf16, #tpu.memory_space<vmem>>, vector<32x128xbf16>
    %cst = arith.constant dense<0.000000e+00> : vector<16x128xf32>
    %2 = tpu.matmul %0, %1, %cst {dimension_numbers = #tpu.dot_dimension_numbers<[1], [0], [0], [1], [0, 0, 1, 1], [], []>} : vector<16x32xbf16>, vector<32x128xbf16>, vector<16x128xf32> -> vector<16x128xf32>
    %c0_3 = arith.constant 0 : index
    %c0_4 = arith.constant 0 : index
    %3 = vector.load %arg5[%c0_3, %c0_4] : memref<16x1xf32, #tpu.memory_space<vmem>>, vector<16x1xf32>
    %4 = vector.broadcast %3 : vector<16x1xf32> to vector<16x128xf32>
    %5 = arith.addf %2, %4 : vector<16x128xf32>
    %c0_5 = arith.constant 0 : index
    %c0_6 = arith.constant 0 : index
    %6 = vector.load %arg6[%c0_5, %c0_6] : memref<16x32xbf16, #tpu.memory_space<vmem>>, vector<16x32xbf16>
    %c0_7 = arith.constant 0 : index
    %c0_8 = arith.constant 0 : index
    %7 = vector.load %arg3[%c0_7, %c0_8] : memref<32x128xbf16, #tpu.memory_space<vmem>>, vector<32x128xbf16>
    %cst_9 = arith.constant dense<0.000000e+00> : vector<16x128xf32>
    %8 = tpu.matmul %6, %7, %cst_9 {dimension_numbers = #tpu.dot_dimension_numbers<[1], [0], [0], [1], [0, 0, 1, 1], [], []>} : vector<16x32xbf16>, vector<32x128xbf16>, vector<16x128xf32> -> vector<16x128xf32>
    %c0_10 = arith.constant 0 : index
    %c0_11 = arith.constant 0 : index
    %9 = vector.load %arg7[%c0_10, %c0_11] : memref<16x1xf32, #tpu.memory_space<vmem>>, vector<16x1xf32>
    %10 = vector.broadcast %9 : vector<16x1xf32> to vector<16x128xf32>
    %11 = arith.addf %8, %10 : vector<16x128xf32>
    %c0_12 = arith.constant 0 : index
    %c0_13 = arith.constant 0 : index
    %12 = vector.load %arg2[%c0_12, %c0_13] : memref<16x128xf32, #tpu.memory_space<vmem>>, vector<16x128xf32>
    %13 = arith.mulf %5, %12 : vector<16x128xf32>
    %14 = arith.mulf %13, %11 : vector<16x128xf32>
    %cst_14 = arith.constant dense<0.000000e+00> : vector<128xf32>
    %15 = vector.multi_reduction <add>, %14, %cst_14 [0] : vector<16x128xf32> to vector<128xf32>
    %16 = vector.shape_cast %15 : vector<128xf32> to vector<1x128xf32>
    %c0_15 = arith.constant 0 : index
    %c0_16 = arith.constant 0 : index
    %17 = vector.load %arg8[%c0_15, %c0_16] : memref<1x128xf32, #tpu.memory_space<vmem>>, vector<1x128xf32>
    tpu.vector_store %arg8[%c0_15, %c0_16], %16 {strides = array<i32>} : memref<1x128xf32, #tpu.memory_space<vmem>>, vector<1x128xf32>,
    return
  }
  func.func @transform_0(%arg0: i32) -> (i32, i32) {
    %c0_i32 = arith.constant 0 : i32
    %c0_i32_0 = arith.constant 0 : i32
    return %c0_i32, %arg0 : i32, i32
  }
  func.func @transform_1(%arg0: i32) -> (i32, i32) {
    %c0_i32 = arith.constant 0 : i32
    %c0_i32_0 = arith.constant 0 : i32
    return %c0_i32, %arg0 : i32, i32
  }
  func.func @transform_2(%arg0: i32) -> (i32, i32) {
    %c0_i32 = arith.constant 0 : i32
    %c0_i32_0 = arith.constant 0 : i32
    return %c0_i32, %arg0 : i32, i32
  }
  func.func @transform_3(%arg0: i32) -> (i32, i32) {
    %c0_i32 = arith.constant 0 : i32
    %c0_i32_0 = arith.constant 0 : i32
    %c0_i32_1 = arith.constant 0 : i32
    return %c0_i32, %c0_i32_0 : i32, i32
  }
  func.func @transform_4(%arg0: i32) -> (i32, i32) {
    %c0_i32 = arith.constant 0 : i32
    %c0_i32_0 = arith.constant 0 : i32
    %c0_i32_1 = arith.constant 0 : i32
    return %c0_i32, %c0_i32_0 : i32, i32
  }
  func.func @transform_5(%arg0: i32) -> (i32, i32) {
    %c0_i32 = arith.constant 0 : i32
    %c0_i32_0 = arith.constant 0 : i32
    %c0_i32_1 = arith.constant 0 : i32
    return %c0_i32, %c0_i32_0 : i32, i32
  }
  func.func @transform_6(%arg0: i32) -> (i32, i32) {
    %c0_i32 = arith.constant 0 : i32
    %c0_i32_0 = arith.constant 0 : i32
    %c0_i32_1 = arith.constant 0 : i32
    return %c0_i32, %c0_i32_0 : i32, i32
  }
  func.func @transform_7(%arg0: i32) -> (i32, i32) {
    %c0_i32 = arith.constant 0 : i32
    %c0_i32_0 = arith.constant 0 : i32
    return %c0_i32, %arg0 : i32, i32
  }
}

</mosaic_0001>

<llo_original>
// kernel: tpu_custom_call.1
$region0: #{tpu_custom_call.1}
  #allocation0 [shape = 'u32[]', space=smem, size = 0x4, offset = 0x4, fixed_abs, tag = 'smem constant byte address 0x4 - core index']
  #allocation1 [shape = 'u32[144,128]{1,0:T(1,128)}', space=vmem, size = 0x12000, scoped, tag = 'internal scratch']
  %s0 = inlined_call_operand.vmem [shape: bf16[32,128], index: 0, kind: input, shape index: {}]
  %s1 = inlined_call_operand.vmem [shape: f32[16,128], index: 1, kind: input, shape index: {}]
  %s2 = inlined_call_operand.hbm [shape: bf16[32,128], index: 2, kind: input, shape index: {}]
  %s3 = inlined_call_operand.vmem [shape: bf16[16,32], index: 3, kind: input, shape index: {}]
  %s4 = inlined_call_operand.vmem [shape: f32[16,1], index: 4, kind: input, shape index: {}]
  %s5 = inlined_call_operand.vmem [shape: bf16[16,32], index: 5, kind: input, shape index: {}]
  %s6 = inlined_call_operand.vmem [shape: f32[16,1], index: 6, kind: input, shape index: {}]
  %s7 = inlined_call_operand.hbm [shape: f32[1,128], index: 7, kind: output, shape index: {}]
  %s8 = sld [smem:[#allocation0]]
  $region42: #{tpu_custom_call.1} parent=0
    _
  %s10 = ssub.s32 1, %s8
  %s11 = scalar_select 0, %s10, %s8
  $region1: #{tpu_custom_call.1} parent=0
    #allocation2 [shape = 'u8[8192]{0}', space=vmem, size = 0x2000, scoped, tag = 'input window, operand 2, single buffered']
    #allocation3 [shape = 's32[1]{0}', space=sflag, size = 0x4, scoped, tag = 'scoped memory for tpu_custom_call.1']
    #allocation4 [shape = 's32[1]{0}', space=sflag, size = 0x4, scoped, tag = 'scoped memory for tpu_custom_call.1']
    #allocation5 [shape = 'u8[512]{0}', space=vmem, size = 0x400, scoped, tag = 'output window, operand 0, single buffered']
    %12 = vsyncpa [#allocation3], 0
    %13 = vsyncpa [#allocation4], 0
    // Predicated region
    $region2: #{tpu_custom_call.1} parent=1 // pred_check
      _
    $region3: #{tpu_custom_call.1} parent=1 // pred_check_branch
      %15 = sbr.rel (0) target = $region5
    $region4: #{tpu_custom_call.1} parent=1 // pred_region
      _
    $region5: #{tpu_custom_call.1} parent=1 // pred_fallthru
      _
    // Predicated region
    $region6: #{tpu_custom_call.1} parent=1 // pred_check
      _
    $region7: #{tpu_custom_call.1} parent=1 // pred_check_branch
      %17 = sbr.rel (0) target = $region9
    $region8: #{tpu_custom_call.1} parent=1 // pred_region
      _
    $region9: #{tpu_custom_call.1} parent=1 // pred_fallthru
      _
    // Predicated region
    $region10: #{tpu_custom_call.1} parent=1 // pred_check
      _
    $region11: #{tpu_custom_call.1} parent=1 // pred_check_branch
      %19 = sbr.rel (0) target = $region13
    $region12: #{tpu_custom_call.1} parent=1 // pred_region
      %s21 = ssub.s32 256, 256
      %22 = vsyncadd [#allocation3], %s21
      %s23 = sshll.u32 [#allocation2], 4
      %s24 = int_to_ptr.vmem [resolvable:$true] %s23
      %29 = dma.hbm_to_vmem [thread:$0]  %s2, 256, %s24, [#allocation3], 64, 64, 4
    $region13: #{tpu_custom_call.1} parent=1 // pred_fallthru
      _
    // Predicated region
    $region14: #{tpu_custom_call.1} parent=1 // pred_check
      _
    $region15: #{tpu_custom_call.1} parent=1 // pred_check_branch
      %31 = sbr.rel (0) target = $region17
    $region16: #{tpu_custom_call.1} parent=1 // pred_region
      _
    $region17: #{tpu_custom_call.1} parent=1 // pred_fallthru
      _
    // Predicated region
    $region18: #{tpu_custom_call.1} parent=1 // pred_check
      _
    $region19: #{tpu_custom_call.1} parent=1 // pred_check_branch
      %33 = sbr.rel (0) target = $region21
    $region20: #{tpu_custom_call.1} parent=1 // pred_region
      _
    $region21: #{tpu_custom_call.1} parent=1 // pred_fallthru
      _
    // Predicated region
    $region22: #{tpu_custom_call.1} parent=1 // pred_check
      _
    $region23: #{tpu_custom_call.1} parent=1 // pred_check_branch
      %35 = sbr.rel (0) target = $region25
    $region24: #{tpu_custom_call.1} parent=1 // pred_region
      _
    $region25: #{tpu_custom_call.1} parent=1 // pred_fallthru
      _
    // Predicated region
    $region26: #{tpu_custom_call.1} parent=1 // pred_check
      _
    $region27: #{tpu_custom_call.1} parent=1 // pred_check_branch
      %37 = sbr.rel (0) target = $region29
    $region28: #{tpu_custom_call.1} parent=1 // pred_region
      _
    $region29: #{tpu_custom_call.1} parent=1 // pred_fallthru
      _
    // Predicated region
    $region30: #{tpu_custom_call.1} parent=1 // pred_check
      _
    $region31: #{tpu_custom_call.1} parent=1 // pred_check_branch
      %39 = sbr.rel (0) target = $region33
    $region32: #{tpu_custom_call.1} parent=1 // pred_region
      %40 = dma.done [#allocation3], 256
    $region33: #{tpu_custom_call.1} parent=1 // pred_fallthru
      _
    %v42 = vld [vmem:[%s3] sm:$0xf]
    %v43 = vld [vmem:[%s3 + $0x4] sm:$0xf]
    %v44 = vld [vmem:[%s0] sm:$0xf]
    %v45 = vld [vmem:[%s0 + $0x4] sm:$0xf]
    %v46 = vld [vmem:[%s0 + $0x8] sm:$0xf]
    %v47 = vld [vmem:[%s0 + $0xc] sm:$0xf]
    %v48 = vld [vmem:[%s4] sm:$0xff]
    %v49 = vld [vmem:[%s4 + $0x8] sm:$0xff]
    %51 = vset.pattern.permute.xlu0 0
    %52 = vperm.xlu0 %51, %v48
    %v53 = vpop.permute.xlu0 %52
    %56 = vset.pattern.permute.xlu0 0
    %57 = vperm.xlu0 %56, %v49
    %v58 = vpop.permute.xlu0 %57
    %v62 = vunpack.c.l.b16 %v42
    %v63 = vunpack.c.l.b16 %v43
    %v64 = vpack.c.b16 %v63, %v62
    %v69 = vunpack.c.l.b16 %v44
    %v70 = vunpack.c.l.b16 %v45
    %v71 = vunpack.c.l.b16 %v46
    %v72 = vunpack.c.l.b16 %v47
    %v73 = vpack.c.b16 %v70, %v69
    %v74 = vpack.c.b16 %v72, %v71
    %vm77 = vcmask 261120
    %v79 = vsel %vm77, %v64, 0
    %81 = vmatprep.subr.bf16.mxu0 0
    %82 = vmatpush1.bf16.msra.mxu0 %v73
    %83 = vmatprep.subr.bf16.mxu0 0
    %84 = vmatpush1.bf16.msra.mxu0 %v74
    %85 = vmatprep.subr.bf16.mxu0 0
    %86 = vmatpush1.bf16.msra.mxu0 0
    %87 = vmatprep.subr.bf16.mxu0 0
    %88 = vmatpush1.bf16.msra.mxu0 0
    %89 = vmatprep.subr.bf16.mxu0 0
    %90 = vmatpush1.bf16.msra.mxu0 0
    %91 = vmatprep.subr.bf16.mxu0 0
    %92 = vmatpush1.bf16.msra.mxu0 0
    %93 = vmatprep.subr.bf16.mxu0 0
    %94 = vmatpush1.bf16.msra.mxu0 0
    %95 = vmatprep.subr.bf16.mxu0 0
    %96 = vmatpush1.bf16.msra.mxu0 0
    %97 = vmatprep.subr.bf16.mxu0 0
    %98 = vmatpush1.bf16.msra.mxu0 0
    %99 = vmatprep.subr.bf16.mxu0 0
    %100 = vmatpush1.bf16.msra.mxu0 0
    %101 = vmatprep.subr.bf16.mxu0 0
    %102 = vmatpush1.bf16.msra.mxu0 0
    %103 = vmatprep.subr.bf16.mxu0 0
    %104 = vmatpush1.bf16.msra.mxu0 0
    %105 = vmatprep.subr.bf16.mxu0 0
    %106 = vmatpush1.bf16.msra.mxu0 0
    %107 = vmatprep.subr.bf16.mxu0 0
    %108 = vmatpush1.bf16.msra.mxu0 0
    %109 = vmatprep.subr.bf16.mxu0 0
    %110 = vmatpush1.bf16.msra.mxu0 0
    %111 = vmatprep.subr.bf16.mxu0 0
    %112 = vmatpush1.bf16.msra.mxu0 0
    %113 = vmatprep.mubr.bf16.mxu0 0
    %114 = vmatmul.mubr.bf16.gmra.mrb[0].mxu0 %v79
    %v115 = vpop.f32.mrb[0].mxu0
    %v116 = vadd.f32 %v53, %v115
    %v117 = vpop.f32.mrb[0].mxu0
    %v118 = vpop.f32.mrb[0].mxu0
    %v119 = vadd.f32 %v58, %v118
    %v120 = vpop.f32.mrb[0].mxu0
    %121 = vdwg.mxu0
    %v122 = vld [vmem:[%s5] sm:$0xf]
    %v123 = vld [vmem:[%s5 + $0x4] sm:$0xf]
    %v124 = vld [vmem:[#allocation2] sm:$0xf]
    %v125 = vld [vmem:[#allocation2 + $0x4] sm:$0xf]
    %v126 = vld [vmem:[#allocation2 + $0x8] sm:$0xf]
    %v127 = vld [vmem:[#allocation2 + $0xc] sm:$0xf]
    %v128 = vld [vmem:[%s6] sm:$0xff]
    %v129 = vld [vmem:[%s6 + $0x8] sm:$0xff]
    %131 = vset.pattern.permute.xlu0 0
    %132 = vperm.xlu0 %131, %v128
    %v133 = vpop.permute.xlu0 %132
    %136 = vset.pattern.permute.xlu0 0
    %137 = vperm.xlu0 %136, %v129
    %v138 = vpop.permute.xlu0 %137
    %v142 = vunpack.c.l.b16 %v122
    %v143 = vunpack.c.l.b16 %v123
    %v144 = vpack.c.b16 %v143, %v142
    %v149 = vunpack.c.l.b16 %v124
    %v150 = vunpack.c.l.b16 %v125
    %v151 = vunpack.c.l.b16 %v126
    %v152 = vunpack.c.l.b16 %v127
    %v153 = vpack.c.b16 %v150, %v149
    %v154 = vpack.c.b16 %v152, %v151
    %v158 = vsel %vm77, %v144, 0
    %160 = vmatprep.subr.bf16.mxu0 0
    %161 = vmatpush1.bf16.msra.mxu0 %v153
    %162 = vmatprep.subr.bf16.mxu0 0
    %163 = vmatpush1.bf16.msra.mxu0 %v154
    %164 = vmatprep.subr.bf16.mxu0 0
    %165 = vmatpush1.bf16.msra.mxu0 0
    %166 = vmatprep.subr.bf16.mxu0 0
    %167 = vmatpush1.bf16.msra.mxu0 0
    %168 = vmatprep.subr.bf16.mxu0 0
    %169 = vmatpush1.bf16.msra.mxu0 0
    %170 = vmatprep.subr.bf16.mxu0 0
    %171 = vmatpush1.bf16.msra.mxu0 0
    %172 = vmatprep.subr.bf16.mxu0 0
    %173 = vmatpush1.bf16.msra.mxu0 0
    %174 = vmatprep.subr.bf16.mxu0 0
    %175 = vmatpush1.bf16.msra.mxu0 0
    %176 = vmatprep.subr.bf16.mxu0 0
    %177 = vmatpush1.bf16.msra.mxu0 0
    %178 = vmatprep.subr.bf16.mxu0 0
    %179 = vmatpush1.bf16.msra.mxu0 0
    %180 = vmatprep.subr.bf16.mxu0 0
    %181 = vmatpush1.bf16.msra.mxu0 0
    %182 = vmatprep.subr.bf16.mxu0 0
    %183 = vmatpush1.bf16.msra.mxu0 0
    %184 = vmatprep.subr.bf16.mxu0 0
    %185 = vmatpush1.bf16.msra.mxu0 0
    %186 = vmatprep.subr.bf16.mxu0 0
    %187 = vmatpush1.bf16.msra.mxu0 0
    %188 = vmatprep.subr.bf16.mxu0 0
    %189 = vmatpush1.bf16.msra.mxu0 0
    %190 = vmatprep.subr.bf16.mxu0 0
    %191 = vmatpush1.bf16.msra.mxu0 0
    %192 = vmatprep.mubr.bf16.mxu0 0
    %193 = vmatmul.mubr.bf16.gmra.mrb[0].mxu0 %v158
    %v194 = vpop.f32.mrb[0].mxu0
    %v195 = vadd.f32 %v133, %v194
    %v196 = vpop.f32.mrb[0].mxu0
    %v197 = vpop.f32.mrb[0].mxu0
    %v198 = vadd.f32 %v138, %v197
    %v199 = vpop.f32.mrb[0].mxu0
    %200 = vdwg.mxu0
    %v201 = vld [vmem:[%s1] sm:$0xff]
    %v202 = vld [vmem:[%s1 + $0x8] sm:$0xff]
    %v203 = vmul.f32 %v116, %v201
    %v204 = vmul.f32 %v119, %v202
    %v205 = vmul.f32 %v203, %v195
    %v206 = vmul.f32 %v204, %v198
    %v207 = vadd.f32 %v205, %v206
    %v208 = vrot.slane %v207, 4
    %v209 = vadd.f32 %v207, %v208
    %v210 = vrot.slane %v209, 2
    %v211 = vadd.f32 %v209, %v210
    %v212 = vrot.slane %v211, 1
    %v213 = vadd.f32 %v211, %v212
    %214 = vst [vmem:[#allocation5] sm:$0x1] %v213
    // Predicated region
    $region34: #{tpu_custom_call.1} parent=1 // pred_check
      _
    $region35: #{tpu_custom_call.1} parent=1 // pred_check_branch
      %216 = sbr.rel (0) target = $region37
    $region36: #{tpu_custom_call.1} parent=1 // pred_region
      %s218 = ssub.s32 16, 16
      %219 = vsyncadd [#allocation4], %s218
      %s221 = sshll.u32 [#allocation5], 4
      %s222 = int_to_ptr.vmem [resolvable:$true] %s221
      %224 = dma.vmem_to_hbm [thread:$0]  %s222, 16, %s7, [#allocation4]
    $region37: #{tpu_custom_call.1} parent=1 // pred_fallthru
      _
    // Predicated region
    $region38: #{tpu_custom_call.1} parent=1 // pred_check
      _
    $region39: #{tpu_custom_call.1} parent=1 // pred_check_branch
      %226 = sbr.rel (0) target = $region41
    $region40: #{tpu_custom_call.1} parent=1 // pred_region
      %227 = dma.done [#allocation4], 16
    $region41: #{tpu_custom_call.1} parent=1 // pred_fallthru
      _
    %228 = vsyncpa [#allocation3], 1
    %229 = vsyncpa [#allocation4], 1

</llo_original>
